<compile_context>
chip_gen: v5e
topology: v5e:2x2
jax: 0.10.0
libtpu: 0.0.40
codegen_flags: <defaults>
</compile_context>

<pallas_src>
import functools

import jax
import jax.numpy as jnp
from jax.experimental import pallas as pl
from jax.experimental.pallas import tpu as pltpu


# ----------------------------------------------------------------------------
# Helpers
# ----------------------------------------------------------------------------
def _round_up(x, m):
    return (x + m - 1) // m * m


def _vmem_budget_bytes():
    """Per-generation VMEM budget (leave ~25% headroom for compiler scratch)."""
    cap = 64 * 1024 * 1024  # unknown generation -> assume the smallest (v7x)
    try:
        info = pltpu.get_tpu_info()
        cap = int(getattr(info, "vmem_capacity_bytes", cap))
    except Exception:
        pass
    return min(cap * 3 // 4, 96 * 1024 * 1024)  # v7x ~48 MiB, v5e/v6e ~96 MiB


def _block_spec(shape, index_map, buffers=None):
    """BlockSpec with optional deeper pipelining; degrades gracefully."""
    if buffers is not None and buffers > 2:
        try:
            return pl.BlockSpec(shape, index_map,
                                pipeline_mode=pl.Buffered(buffers))
        except Exception:
            pass  # older jax: fall back to the default double buffering
    return pl.BlockSpec(shape, index_map)


# ----------------------------------------------------------------------------
# Fused path: patch extraction inside the kernel (Wp % 16 == 0)
# ----------------------------------------------------------------------------
def _fused_kernel(x_ref, w_ref, b_ref, o_ref):
    """One row-tile of patches.

    x_ref: (R, p, Wp, p*C) bf16 window of the zero-copy NHWC reshape of x.
           Row r, pixel-row pr holds the (Wp, p*C) LHS rows of Wp patches.
    w_ref: (p, p*C, E) bf16, fully resident (per-pixel-row weight slabs).
    b_ref: (1, E) f32, resident.
    o_ref: (R*Wp, E) f32 output tile.
    """
    R, p, Wp, pC = x_ref.shape
    E = o_ref.shape[-1]
    acc = jnp.zeros((R * Wp, E), jnp.float32)
    for pr in range(p):  # static, small (p ~ 4..16); one MXU dot per pixel-row
        # Free reshape: Wp % 16 == 0 keeps the bf16 (16,128) tiling intact.
        lhs = x_ref[:, pr].reshape(R * Wp, pC)
        acc = acc + jnp.dot(lhs, w_ref[pr], preferred_element_type=jnp.float32)
    o_ref[...] = acc + b_ref[...]


def _choose_rows(nrows, bytes_per_row, budget, rows_override=None):
    if rows_override is None:
        target = min(8 * 1024 * 1024, budget // 8)  # per-buffer LHS bytes
        R = max(1, min(nrows, target // max(bytes_per_row, 1)))
        if nrows >= 2:                       # >= 2 row tiles -> v7x megacore
            R = min(R, (nrows + 1) // 2)
    else:
        R = max(1, min(int(rows_override), nrows))
    while nrows % R:                          # exact division (no OOB rows)
        R -= 1
    return R


def _patch_embed_fused(x_r, w_px, bias, *, budget, rows_per_tile=None,
                       lhs_buffers=3):
    nrows, p, Wp, pC = x_r.shape
    E = w_px.shape[-1]
    R = _choose_rows(nrows, p * Wp * pC * x_r.dtype.itemsize, budget,
                     rows_per_tile)
    M = nrows * Wp
    grid = (nrows // R,)

    return pl.pallas_call(
        _fused_kernel,
        out_shape=jax.ShapeDtypeStruct((M, E), jnp.float32),
        grid_spec=pltpu.PrefetchScalarGridSpec(
            num_scalar_prefetch=0,
            grid=grid,
            in_specs=[
                # LHS: the only HBM stream; deeper-buffered if supported.
                _block_spec((R, p, Wp, pC), lambda i: (i, 0, 0, 0),
                            lhs_buffers),
                # Weight + bias: constant index_map -> resident in VMEM.
                pl.BlockSpec((p, pC, E), lambda i: (0, 0, 0)),
                pl.BlockSpec((1, E), lambda i: (0, 0)),
            ],
            out_specs=pl.BlockSpec((R * Wp, E), lambda i: (i, 0)),
        ),
        compiler_params=pltpu.CompilerParams(
            dimension_semantics=("parallel",),   # row tiles shard across TCs
            vmem_limit_bytes=budget,
        ),
    )(x_r, w_px, bias)


# ----------------------------------------------------------------------------
# Fallback path: materialized patches + tiled matmul (general shapes)
# ----------------------------------------------------------------------------
def _matmul_kernel(x_ref, w_ref, b_ref, o_ref, *, tk):
    """(tm, tk) x (tk, E) partial product, accumulated directly into o_ref."""
    k = pl.program_id(1)
    K = w_ref.shape[0]
    if tk == K:                     # single reduction step: use the whole weight
        w = w_ref[...]
    else:                           # K-tiled: weight resident, slice per step
        w = w_ref[pl.ds(pl.multiple_of(k * tk, tk), tk), :]
    part = jnp.dot(x_ref[...], w, preferred_element_type=jnp.float32)

    @pl.when(k == 0)
    def _init():                    # first partial written directly, bias folded
        o_ref[...] = part + b_ref[...]

    @pl.when(k > 0)
    def _accumulate():
        o_ref[...] += part


def _choose_tiles(M, K, itemsize, budget, tm=None, tk=None):
    per_buf = min(8 * 1024 * 1024, budget // 8)
    if tk is None:
        # Collapse K (no reduction axis work) whenever the triple-buffered LHS
        # stream fits; else the largest multiple of 128 (<=4096) dividing K.
        if K <= 4096 or 3 * 256 * K * itemsize <= budget // 2:
            tk = K
        else:
            tk = next((c for c in range(4096, 127, -128) if K % c == 0), K)
    elif K % tk != 0:
        raise ValueError(
            f"tk={tk} must divide K={K} (a partial K block would feed garbage "
            "into the reduction)")
    if tm is None:
        tm = max(16, min(512, per_buf // max(tk * itemsize, 1)))
    tm = max(16, min(tm, _round_up(M, 16)))
    if M >= 32:  # keep >= 2 M tiles so the parallel axis can split (v7x)
        tm = min(tm, _round_up(-(-M // 2), 16))
    tm = max(16, (tm // 16) * 16)     # bf16 sublane packing
    return tm, tk


def _patch_linear_tiled(patches, w, bias, *, budget, tm=None, tk=None,
                        lhs_buffers=3):
    M, K = patches.shape
    Kw, E = w.shape
    assert Kw == K, (Kw, K)
    tm, tk = _choose_tiles(M, K, patches.dtype.itemsize, budget, tm, tk)
    grid = (pl.cdiv(M, tm), K // tk)  # reduction axis last
    # NOTE: a partial last M tile reads undefined rows; they only feed output
    # rows that are clipped on writeback, so results are unaffected.

    return pl.pallas_call(
        functools.partial(_matmul_kernel, tk=tk),
        out_shape=jax.ShapeDtypeStruct((M, E), jnp.float32),
        grid_spec=pltpu.PrefetchScalarGridSpec(
            num_scalar_prefetch=0,
            grid=grid,
            in_specs=[
                _block_spec((tm, tk), lambda i, k: (i, k), lhs_buffers),
                pl.BlockSpec((K, E), lambda i, k: (0, 0)),   # resident weight
                pl.BlockSpec((1, E), lambda i, k: (0, 0)),   # resident bias
            ],
            out_specs=pl.BlockSpec((tm, E), lambda i, k: (i, 0)),
        ),
        compiler_params=pltpu.CompilerParams(
            dimension_semantics=("parallel", "arbitrary"),
            vmem_limit_bytes=budget,
        ),
    )(patches, w, bias)


# ----------------------------------------------------------------------------
# Module
# ----------------------------------------------------------------------------
class PatchEmbedding:
    """JAX/Pallas port of the PyTorch PatchEmbedding module.

    Matches x.unfold(2,p,p).unfold(3,p,p).permute(0,2,3,1,4,5).view(B,-1,C*p*p)
    followed by nn.Linear(C*p*p, E): per-patch features ordered (c, pr, pc).
    """

    def __init__(self, in_channels=384, patch_size=5, emb_size=16, key=None,
                 compute_dtype=jnp.bfloat16):
        self.in_channels = in_channels
        self.patch_size = patch_size
        self.emb_size = emb_size
        self.compute_dtype = compute_dtype
        C, p, E = in_channels, patch_size, emb_size
        K = C * p * p
        if key is None:
            key = jax.random.PRNGKey(0)
        kw, kb = jax.random.split(key)
        # nn.Linear default init: U(-1/sqrt(fan_in), 1/sqrt(fan_in)); params f32.
        bound = 1.0 / (K ** 0.5)
        # Stored as (K, E) == W^T of nn.Linear's (E, K); K ordered (c, pr, pc).
        self.weight_t = jax.random.uniform(kw, (K, E), jnp.float32, -bound, bound)
        self.bias = jax.random.uniform(kb, (1, E), jnp.float32, -bound, bound)

        # Pre-cast / pre-permuted operands (no per-call astype of the params).
        self.weight_kE = self.weight_t.astype(compute_dtype)  # fallback path
        # Fused path: per pixel-row pr a (p*C, E) slab with features ordered
        # (pc, c) to match the NHWC memory order read by the kernel.
        self.weight_px = (self.weight_t.reshape(C, p, p, E)
                          .transpose(1, 2, 0, 3)       # (p, p, C, E)
                          .reshape(p, p * C, E)
                          .astype(compute_dtype))
        self._vmem_budget = _vmem_budget_bytes()

    def __call__(self, x, *, rows_per_tile=None, tm=None, tk=None,
                 lhs_buffers=3):
        # x: (B, C, H, W) float32, NCHW — same as PyTorch.
        B, C, H, W = x.shape
        p, E = self.patch_size, self.emb_size
        Hp, Wp = H // p, W // p
        x = x[:, :, :Hp * p, :Wp * p]  # PyTorch unfold drops the remainder
        budget = self._vmem_budget

        if Wp % 16 == 0:
            # Fused patch extraction: the kernel reads this buffer exactly once
            # (the reshape below is zero-copy on the NHWC layout).
            x_nhwc = jnp.transpose(x, (0, 2, 3, 1)).astype(self.compute_dtype)
            x_r = x_nhwc.reshape(B * Hp, p, Wp, p * C)
            out2d = _patch_embed_fused(
                x_r, self.weight_px, self.bias, budget=budget,
                rows_per_tile=rows_per_tile, lhs_buffers=lhs_buffers)
        else:
            # General fallback: materialize PyTorch-ordered patches in bf16
            # (cast fuses into the transpose under jit) and run the tiled
            # projection with a resident weight.
            xc = x.astype(self.compute_dtype)
            patches = jnp.transpose(
                xc.reshape(B, C, Hp, p, Wp, p), (0, 2, 4, 1, 3, 5)
            ).reshape(B * Hp * Wp, C * p * p)
            out2d = _patch_linear_tiled(
                patches, self.weight_kE, self.bias, budget=budget,
                tm=tm, tk=tk, lhs_buffers=lhs_buffers)

        return out2d.reshape(B, Hp * Wp, E)


# ----------------------------------------------------------------------------
# Self-test
# ----------------------------------------------------------------------------
def _pytorch_patches(x, p):
    B, C, H, W = x.shape
    Hp, Wp = H // p, W // p
    x = x[:, :, :Hp * p, :Wp * p]
    return jnp.transpose(
        x.reshape(B, C, Hp, p, Wp, p), (0, 2, 4, 1, 3, 5)
    ).reshape(B, Hp * Wp, C * p * p), Hp, Wp


def _check(out, x, mod):
    p = mod.patch_size
    patches_f32, Hp, Wp = _pytorch_patches(x, p)
    assert out.shape == (x.shape[0], Hp * Wp, mod.emb_size), out.shape

    # Reference 1: same bf16-rounded operands, f32 math -> tight tolerance.
    xb = x.astype(jnp.bfloat16).astype(jnp.float32)
    patches_bf, _, _ = _pytorch_patches(xb, p)
    wb = mod.weight_t.astype(jnp.bfloat16).astype(jnp.float32)
    ref_bf = patches_bf @ wb + mod.bias[0]
    assert jnp.allclose(out, ref_bf, atol=2e-3, rtol=2e-3), (
        float(jnp.max(jnp.abs(out - ref_bf))))

    # Reference 2: full-f32 PyTorch-equivalent math -> loose tolerance
    # (only difference is the bf16 operand rounding).
    ref_f32 = patches_f32 @ mod.weight_t + mod.bias[0]
    assert jnp.allclose(out, ref_f32, atol=8e-2, rtol=8e-2), (
        float(jnp.max(jnp.abs(out - ref_f32))))


if __name__ == "__main__":
    key = jax.random.PRNGKey(0)
    k1, k2, k3, k4 = jax.random.split(key, 4)

    # ---- Test 1: fused patch-extraction path (Wp % 16 == 0) ----------------
    B, C, H, W = 2, 32, 64, 64
    p, E = 4, 32                       # Hp = Wp = 16, K = 512, M = 512
    x = jax.random.normal(k1, (B, C, H, W), jnp.float32)
    mod = PatchEmbedding(in_channels=C, patch_size=p, emb_size=E, key=k2)

    def fwd(inp, lhs_buffers=3):
        # rows_per_tile=8 -> 4 row tiles: exercises the pipelined multi-step grid.
        return mod(inp, rows_per_tile=8, lhs_buffers=lhs_buffers)

    try:
        out = jax.block_until_ready(jax.jit(fwd)(x))
    except Exception:
        # Graceful degradation if pl.Buffered(3) is not supported here.
        out = jax.block_until_ready(jax.jit(lambda a: fwd(a, None))(x))
    _check(out, x, mod)

    # ---- Test 2: fallback tiled-matmul path (Wp % 16 != 0) -----------------
    B2, C2, H2, W2 = 2, 32, 24, 24
    p2, E2 = 4, 16                     # Hp = Wp = 6, K = 512, M = 72
    x2 = jax.random.normal(k3, (B2, C2, H2, W2), jnp.float32)
    mod2 = PatchEmbedding(in_channels=C2, patch_size=p2, emb_size=E2, key=k4)

    def fwd2(inp, lhs_buffers=3):
        # tm=16, tk=256 -> grid (5, 2): exercises K accumulation and a partial
        # M tile in addition to the single-step default heuristics.
        return mod2(inp, tm=16, tk=256, lhs_buffers=lhs_buffers)

    try:
        out2 = jax.block_until_ready(jax.jit(fwd2)(x2))
    except Exception:
        out2 = jax.block_until_ready(jax.jit(lambda a: fwd2(a, None))(x2))
    _check(out2, x2, mod2)

    print("KERNEL_OK")
</pallas_src>

<mosaic_0001>
module attributes {stable_mosaic.version = 11 : i64} {
  func.func @_fused_kernel(%arg0: i32, %arg1: memref<8x4x16x128xbf16, #tpu.memory_space<vmem>>, %arg2: memref<4x128x32xbf16, #tpu.memory_space<vmem>>, %arg3: memref<1x32xf32, #tpu.memory_space<vmem>>, %arg4: memref<128x32xf32, #tpu.memory_space<vmem>>) attributes {dimension_semantics = [#tpu.dimension_semantics<parallel>], iteration_bounds = array<i64: 4>, scalar_prefetch = 0 : i64, scratch_operands = 0 : i64, tpu.core_type = #tpu.core_type<tc>, window_params = [{transform_indices = @transform_0, window_bounds = array<i64: 8, 4, 16, 128>}, {pipeline_mode = #tpu.pipeline_mode<synchronous>, transform_indices = @transform_1, window_bounds = array<i64: 4, 128, 32>}, {pipeline_mode = #tpu.pipeline_mode<synchronous>, transform_indices = @transform_2, window_bounds = array<i64: 1, 32>}, {transform_indices = @transform_3, window_bounds = array<i64: 128, 32>}]} {
    %cst = arith.constant 0.000000e+00 : f32
    %0 = vector.broadcast %cst : f32 to vector<128x32xf32>
    %c0 = arith.constant 0 : index
    %c0_0 = arith.constant 0 : index
    %c0_1 = arith.constant 0 : index
    %c0_2 = arith.constant 0 : index
    %1 = vector.load %arg1[%c0, %c0_0, %c0_1, %c0_2] : memref<8x4x16x128xbf16, #tpu.memory_space<vmem>>, vector<8x1x16x128xbf16>
    %2 = vector.shape_cast %1 : vector<8x1x16x128xbf16> to vector<8x16x128xbf16>
    %3 = vector.shape_cast %2 : vector<8x16x128xbf16> to vector<128x128xbf16>
    %c0_3 = arith.constant 0 : index
    %c0_4 = arith.constant 0 : index
    %c0_5 = arith.constant 0 : index
    %4 = vector.load %arg2[%c0_3, %c0_4, %c0_5] : memref<4x128x32xbf16, #tpu.memory_space<vmem>>, vector<1x128x32xbf16>
    %5 = vector.shape_cast %4 : vector<1x128x32xbf16> to vector<128x32xbf16>
    %cst_6 = arith.constant dense<0.000000e+00> : vector<128x32xf32>
    %6 = tpu.matmul %3, %5, %cst_6 {dimension_numbers = #tpu.dot_dimension_numbers<[1], [0], [0], [1], [0, 0, 1, 1], [], []>} : vector<128x128xbf16>, vector<128x32xbf16>, vector<128x32xf32> -> vector<128x32xf32>
    %7 = arith.addf %0, %6 : vector<128x32xf32>
    %c0_7 = arith.constant 0 : index
    %c1 = arith.constant 1 : index
    %c0_8 = arith.constant 0 : index
    %c0_9 = arith.constant 0 : index
    %8 = vector.load %arg1[%c0_7, %c1, %c0_8, %c0_9] : memref<8x4x16x128xbf16, #tpu.memory_space<vmem>>, vector<8x1x16x128xbf16>
    %9 = vector.shape_cast %8 : vector<8x1x16x128xbf16> to vector<8x16x128xbf16>
    %10 = vector.shape_cast %9 : vector<8x16x128xbf16> to vector<128x128xbf16>
    %c1_10 = arith.constant 1 : index
    %c0_11 = arith.constant 0 : index
    %c0_12 = arith.constant 0 : index
    %11 = vector.load %arg2[%c1_10, %c0_11, %c0_12] : memref<4x128x32xbf16, #tpu.memory_space<vmem>>, vector<1x128x32xbf16>
    %12 = vector.shape_cast %11 : vector<1x128x32xbf16> to vector<128x32xbf16>
    %cst_13 = arith.constant dense<0.000000e+00> : vector<128x32xf32>
    %13 = tpu.matmul %10, %12, %cst_13 {dimension_numbers = #tpu.dot_dimension_numbers<[1], [0], [0], [1], [0, 0, 1, 1], [], []>} : vector<128x128xbf16>, vector<128x32xbf16>, vector<128x32xf32> -> vector<128x32xf32>
    %14 = arith.addf %7, %13 : vector<128x32xf32>
    %c0_14 = arith.constant 0 : index
    %c2 = arith.constant 2 : index
    %c0_15 = arith.constant 0 : index
    %c0_16 = arith.constant 0 : index
    %15 = vector.load %arg1[%c0_14, %c2, %c0_15, %c0_16] : memref<8x4x16x128xbf16, #tpu.memory_space<vmem>>, vector<8x1x16x128xbf16>
    %16 = vector.shape_cast %15 : vector<8x1x16x128xbf16> to vector<8x16x128xbf16>
    %17 = vector.shape_cast %16 : vector<8x16x128xbf16> to vector<128x128xbf16>
    %c2_17 = arith.constant 2 : index
    %c0_18 = arith.constant 0 : index
    %c0_19 = arith.constant 0 : index
    %18 = vector.load %arg2[%c2_17, %c0_18, %c0_19] : memref<4x128x32xbf16, #tpu.memory_space<vmem>>, vector<1x128x32xbf16>
    %19 = vector.shape_cast %18 : vector<1x128x32xbf16> to vector<128x32xbf16>
    %cst_20 = arith.constant dense<0.000000e+00> : vector<128x32xf32>
    %20 = tpu.matmul %17, %19, %cst_20 {dimension_numbers = #tpu.dot_dimension_numbers<[1], [0], [0], [1], [0, 0, 1, 1], [], []>} : vector<128x128xbf16>, vector<128x32xbf16>, vector<128x32xf32> -> vector<128x32xf32>
    %21 = arith.addf %14, %20 : vector<128x32xf32>
    %c0_21 = arith.constant 0 : index
    %c3 = arith.constant 3 : index
    %c0_22 = arith.constant 0 : index
    %c0_23 = arith.constant 0 : index
    %22 = vector.load %arg1[%c0_21, %c3, %c0_22, %c0_23] : memref<8x4x16x128xbf16, #tpu.memory_space<vmem>>, vector<8x1x16x128xbf16>
    %23 = vector.shape_cast %22 : vector<8x1x16x128xbf16> to vector<8x16x128xbf16>
    %24 = vector.shape_cast %23 : vector<8x16x128xbf16> to vector<128x128xbf16>
    %c3_24 = arith.constant 3 : index
    %c0_25 = arith.constant 0 : index
    %c0_26 = arith.constant 0 : index
    %25 = vector.load %arg2[%c3_24, %c0_25, %c0_26] : memref<4x128x32xbf16, #tpu.memory_space<vmem>>, vector<1x128x32xbf16>
    %26 = vector.shape_cast %25 : vector<1x128x32xbf16> to vector<128x32xbf16>
    %cst_27 = arith.constant dense<0.000000e+00> : vector<128x32xf32>
    %27 = tpu.matmul %24, %26, %cst_27 {dimension_numbers = #tpu.dot_dimension_numbers<[1], [0], [0], [1], [0, 0, 1, 1], [], []>} : vector<128x128xbf16>, vector<128x32xbf16>, vector<128x32xf32> -> vector<128x32xf32>
    %28 = arith.addf %21, %27 : vector<128x32xf32>
    %c0_28 = arith.constant 0 : index
    %c0_29 = arith.constant 0 : index
    %29 = vector.load %arg3[%c0_28, %c0_29] : memref<1x32xf32, #tpu.memory_space<vmem>>, vector<1x32xf32>
    %30 = vector.broadcast %29 : vector<1x32xf32> to vector<128x32xf32>
    %31 = arith.addf %28, %30 : vector<128x32xf32>
    %c0_30 = arith.constant 0 : index
    %c0_31 = arith.constant 0 : index
    %32 = vector.load %arg4[%c0_30, %c0_31] : memref<128x32xf32, #tpu.memory_space<vmem>>, vector<128x32xf32>
    tpu.vector_store %arg4[%c0_30, %c0_31], %31 {strides = array<i32>} : memref<128x32xf32, #tpu.memory_space<vmem>>, vector<128x32xf32>,
    return
  }
  func.func @transform_0(%arg0: i32) -> (i32, i32, i32, i32) {
    %c0_i32 = arith.constant 0 : i32
    %c0_i32_0 = arith.constant 0 : i32
    %c0_i32_1 = arith.constant 0 : i32
    %c0_i32_2 = arith.constant 0 : i32
    return %arg0, %c0_i32, %c0_i32_0, %c0_i32_1 : i32, i32, i32, i32
  }
  func.func @transform_1(%arg0: i32) -> (i32, i32, i32) {
    %c0_i32 = arith.constant 0 : i32
    %c0_i32_0 = arith.constant 0 : i32
    %c0_i32_1 = arith.constant 0 : i32
    %c0_i32_2 = arith.constant 0 : i32
    return %c0_i32, %c0_i32_0, %c0_i32_1 : i32, i32, i32
  }
  func.func @transform_2(%arg0: i32) -> (i32, i32) {
    %c0_i32 = arith.constant 0 : i32
    %c0_i32_0 = arith.constant 0 : i32
    %c0_i32_1 = arith.constant 0 : i32
    return %c0_i32, %c0_i32_0 : i32, i32
  }
  func.func @transform_3(%arg0: i32) -> (i32, i32) {
    %c0_i32 = arith.constant 0 : i32
    %c0_i32_0 = arith.constant 0 : i32
    return %arg0, %c0_i32 : i32, i32
  }
}

</mosaic_0001>

<llo_original>
// kernel: _lambda_.1
$region0: #{_lambda_.1}
  #allocation0 [shape = 'u32[]', space=smem, size = 0x4, offset = 0x4, fixed_abs, tag = 'smem constant byte address 0x4 - core index']
  #allocation1 [shape = 'u32[72,128]{1,0:T(1,128)}', space=vmem, size = 0x9000, scoped, tag = 'internal scratch']
  %s0 = inlined_call_operand.vmem [shape: bf16[32,4,16,128], index: 0, kind: input, shape index: {}]
  %s1 = inlined_call_operand.vmem [shape: bf16[4,128,32], index: 1, kind: input, shape index: {}]
  %s2 = inlined_call_operand.vmem [shape: f32[1,32], index: 2, kind: input, shape index: {}]
  %s3 = inlined_call_operand.vmem [shape: f32[512,32], index: 3, kind: output, shape index: {}]
  %s4 = sld [smem:[#allocation0]]
  $region45: #{_lambda_.1} parent=0
    _
  %s6 = ssub.s32 1, %s4
  %s7 = scalar_select 0, %s6, %s4
  loop: start=0, step=1, limit=6
  $region2: #{_lambda_.1} parent=0 // loop_pre_header
    _
  $region3: #{_lambda_.1} parent=0 // loop_header
    %s9 = sphi 0, %s13
    %p10 = scmp.ge.s32.totalorder %s9, 6
    %s19 = sphi 0, %s21
    %s22 = sphi 0, %s19
    %s23 = sphi 0, %s22
    %s39 = sphi 0, %s23
    %s43 = sphi 0, %s43
    %s45 = sphi 0, %s43
    %s46 = sphi 0, %s45
    %s60 = sphi 0, %s46
    %s64 = sphi 0, %s64
    %s66 = sphi 0, %s64
    %s67 = sphi 0, %s66
    %s81 = sphi 0, %s67
    %s87 = sphi 0, %s89
    %s90 = sphi 0, %s87
    %s91 = sphi 0, %s90
    %s107 = sphi 0, %s91
  $region4: #{_lambda_.1} parent=0 // loop_header_branch
    %12 = sbr.rel (%p10) target = $region8
  $region5: #{_lambda_.1} parent=0 // loop_body
    %s14 = ssub.s32 %s9, 1
    %s15 = ssub.s32 %s9, 2
    %s16 = sadd.s32 %s9, 1
    %s17 = ssub.s32 %s9, %s16
    %p18 = scmp.eq.s32.totalorder %s17, 0
    %s20 = sadd.s32 %s19, 1
    %s21 = scalar_select %p18, %s19, %s20
    %p24 = pneg %p18
    %p25 = scmp.eq.s32.totalorder %s9, 3
    %p26 = por %p24, %p25
    %p27 = scmp.ne.s32.totalorder %s19, %s22
    %p28 = scmp.eq.s32.totalorder %s9, 0
    %p29 = por %p27, %p28
    %p30 = scmp.ne.s32.totalorder %s19, %s22
    %p31 = scmp.eq.s32.totalorder %s14, 3
    %p32 = por %p30, %p31
    %p33 = scmp.ne.s32.totalorder %s22, %s23
    %p34 = scmp.eq.s32.totalorder %s14, 0
    %p35 = por %p33, %p34
    %p36 = scmp.ne.s32.totalorder %s22, %s23
    %p37 = scmp.eq.s32.totalorder %s15, 3
    %p38 = por %p36, %p37
    %p40 = scmp.ne.s32.totalorder %s23, %s39
    %p41 = scmp.eq.s32.totalorder %s15, 0
    %p42 = por %p40, %p41
    %s44 = sadd.s32 %s43, 1
    %p47 = scmp.eq.s32.totalorder %s9, 3
    %p48 = scmp.ne.s32.totalorder %s43, %s45
    %p49 = scmp.eq.s32.totalorder %s9, 0
    %p50 = por %p48, %p49
    %p51 = scmp.ne.s32.totalorder %s43, %s45
    %p52 = scmp.eq.s32.totalorder %s14, 3
    %p53 = por %p51, %p52
    %p54 = scmp.ne.s32.totalorder %s45, %s46
    %p55 = scmp.eq.s32.totalorder %s14, 0
    %p56 = por %p54, %p55
    %p57 = scmp.ne.s32.totalorder %s45, %s46
    %p58 = scmp.eq.s32.totalorder %s15, 3
    %p59 = por %p57, %p58
    %p61 = scmp.ne.s32.totalorder %s46, %s60
    %p62 = scmp.eq.s32.totalorder %s15, 0
    %p63 = por %p61, %p62
    %s65 = sadd.s32 %s64, 1
    %p68 = scmp.eq.s32.totalorder %s9, 3
    %p69 = scmp.ne.s32.totalorder %s64, %s66
    %p70 = scmp.eq.s32.totalorder %s9, 0
    %p71 = por %p69, %p70
    %p72 = scmp.ne.s32.totalorder %s64, %s66
    %p73 = scmp.eq.s32.totalorder %s14, 3
    %p74 = por %p72, %p73
    %p75 = scmp.ne.s32.totalorder %s66, %s67
    %p76 = scmp.eq.s32.totalorder %s14, 0
    %p77 = por %p75, %p76
    %p78 = scmp.ne.s32.totalorder %s66, %s67
    %p79 = scmp.eq.s32.totalorder %s15, 3
    %p80 = por %p78, %p79
    %p82 = scmp.ne.s32.totalorder %s67, %s81
    %p83 = scmp.eq.s32.totalorder %s15, 0
    %p84 = por %p82, %p83
    %s85 = ssub.s32 %s9, %s16
    %p86 = scmp.eq.s32.totalorder %s85, 0
    %s88 = sadd.s32 %s87, 1
    %s89 = scalar_select %p86, %s87, %s88
    %p92 = pneg %p86
    %p93 = scmp.eq.s32.totalorder %s9, 3
    %p94 = por %p92, %p93
    %p95 = scmp.ne.s32.totalorder %s87, %s90
    %p96 = scmp.eq.s32.totalorder %s9, 0
    %p97 = por %p95, %p96
    %p98 = scmp.ne.s32.totalorder %s87, %s90
    %p99 = scmp.eq.s32.totalorder %s14, 3
    %p100 = por %p98, %p99
    %p101 = scmp.ne.s32.totalorder %s90, %s91
    %p102 = scmp.eq.s32.totalorder %s14, 0
    %p103 = por %p101, %p102
    %p104 = scmp.ne.s32.totalorder %s90, %s91
    %p105 = scmp.eq.s32.totalorder %s15, 3
    %p106 = por %p104, %p105
    %p108 = scmp.ne.s32.totalorder %s91, %s107
    %p109 = scmp.eq.s32.totalorder %s15, 0
    %p110 = por %p108, %p109
    %p111 = scmp.le.s32.totalorder 1, %s9
    %p112 = scmp.lt.s32.totalorder %s9, 5
    %p113 = pnand %p111, %p112
    %p114 = pneg %p113
    // Predicated region
    $region9: #{_lambda_.1} parent=5 // pred_check
      _
    $region10: #{_lambda_.1} parent=5 // pred_check_branch
      %116 = sbr.rel (%p113) target = $region12
    $region11: #{_lambda_.1} parent=5 // pred_region
      %s117 = ssub.s32 %s9, 1
      // Predicated region
      $region13: #{_lambda_.1} parent=11 // pred_check
        %p118 = pneg %p56
      $region14: #{_lambda_.1} parent=11 // pred_check_branch
        %120 = sbr.rel (%p118) target = $region16
      $region15: #{_lambda_.1} parent=11 // pred_region
        _
      $region16: #{_lambda_.1} parent=11 // pred_fallthru
        _
      // Predicated region
      $region17: #{_lambda_.1} parent=11 // pred_check
        %p121 = pneg %p77
      $region18: #{_lambda_.1} parent=11 // pred_check_branch
        %123 = sbr.rel (%p121) target = $region20
      $region19: #{_lambda_.1} parent=11 // pred_region
        _
      $region20: #{_lambda_.1} parent=11 // pred_fallthru
        _
    $region12: #{_lambda_.1} parent=5 // pred_fallthru
      _
    %p124 = scmp.lt.s32.totalorder %s9, 4
    // Predicated region
    $region21: #{_lambda_.1} parent=5 // pred_check
      %p125 = pneg %p124
    $region22: #{_lambda_.1} parent=5 // pred_check_branch
      %127 = sbr.rel (%p125) target = $region24
    $region23: #{_lambda_.1} parent=5 // pred_region
      // Predicated region
      $region25: #{_lambda_.1} parent=23 // pred_check
        %p128 = pneg %p29
      $region26: #{_lambda_.1} parent=23 // pred_check_branch
        %130 = sbr.rel (%p128) target = $region28
      $region27: #{_lambda_.1} parent=23 // pred_region
        %s131 = smul.u32 8, %s9
        %p132 = scmp.lt.s32.totalorder %s131, 31
        %s133 = scalar_select %p132, %s131, 31
        %s134 = smul.addr %s133, 8
        %s135 = smul.addr %s134, 4
        %s136 = scalar_lea.vmem %s0, %s135
        %s137 = smul.u32 8, %s9
      $region28: #{_lambda_.1} parent=23 // pred_fallthru
        _
    $region24: #{_lambda_.1} parent=5 // pred_fallthru
      _
    %p138 = scmp.le.s32.totalorder 1, %s9
    %p139 = scmp.lt.s32.totalorder %s9, 5
    %p140 = pnand %p138, %p139
    %p141 = pneg %p140
    // Predicated region
    $region29: #{_lambda_.1} parent=5 // pred_check
      _
    $region30: #{_lambda_.1} parent=5 // pred_check_branch
      %143 = sbr.rel (%p140) target = $region32
    $region31: #{_lambda_.1} parent=5 // pred_region
      %s144 = ssub.s32 %s9, 1
      %s145 = smul.u32 8, %s14
      %p146 = scmp.lt.s32.totalorder %s145, 31
      %s147 = scalar_select %p146, %s145, 31
      %s148 = smul.addr %s147, 8
      %s149 = smul.addr %s148, 4
      %s150 = scalar_lea.vmem %s0, %s149
      %p151 = pneg %p35
      %p152 = pneg %p32
      %p153 = pneg %p56
      %p154 = pneg %p53
      %p155 = pneg %p77
      %p156 = pneg %p74
      %p157 = pneg %p103
      %p158 = pneg %p100
      %s159 = smul.u32 16, %s14
      %p160 = scmp.lt.s32.totalorder %s159, 63
      %s161 = scalar_select %p160, %s159, 63
      %s162 = smul.addr %s161, 8
      %s163 = scalar_lea.vmem %s3, %s162
      %s164 = smul.u32 8, %s14
      %p165 = scmp.lt.s32.totalorder %s164, 31
      %s166 = scalar_select %p165, %s164, 31
      %s167 = smul.addr %s166, 8
      %s168 = smul.addr %s167, 4
      %s169 = scalar_lea.vmem %s0, %s168
      %s170 = smul.u32 8, %s14
      %s171 = smul.u32 16, %s14
      %p172 = scmp.lt.s32.totalorder %s171, 63
      %s173 = scalar_select %p172, %s171, 63
      %s174 = smul.addr %s173, 8
      %s175 = scalar_lea.vmem %s3, %s174
      %s176 = smul.u32 16, %s14
      %v177 = vld [vmem:[%s169] sm:$0xf]
      %v178 = vld [vmem:[%s169 + $0x4] sm:$0xf]
      %v179 = vld [vmem:[%s169 + $0x20] sm:$0xf]
      %v180 = vld [vmem:[%s169 + $0x24] sm:$0xf]
      %v181 = vld [vmem:[%s169 + $0x40] sm:$0xf]
      %v182 = vld [vmem:[%s169 + $0x44] sm:$0xf]
      %v183 = vld [vmem:[%s169 + $0x60] sm:$0xf]
      %v184 = vld [vmem:[%s169 + $0x64] sm:$0xf]
      %v185 = vld [vmem:[%s169 + $0x80] sm:$0xf]
      %v186 = vld [vmem:[%s169 + $0x84] sm:$0xf]
      %v187 = vld [vmem:[%s169 + $0xa0] sm:$0xf]
      %v188 = vld [vmem:[%s169 + $0xa4] sm:$0xf]
      %v189 = vld [vmem:[%s169 + $0xc0] sm:$0xf]
      %v190 = vld [vmem:[%s169 + $0xc4] sm:$0xf]
      %v191 = vld [vmem:[%s169 + $0xe0] sm:$0xf]
      %v192 = vld [vmem:[%s169 + $0xe4] sm:$0xf]
      %v193 = vld [vmem:[%s1] sm:$0xf]
      %v194 = vld [vmem:[%s1 + $0x4] sm:$0xf]
      %v195 = vld [vmem:[%s1 + $0x8] sm:$0xf]
      %v196 = vld [vmem:[%s1 + $0xc] sm:$0xf]
      %v197 = vld [vmem:[%s1 + $0x10] sm:$0xf]
      %v198 = vld [vmem:[%s1 + $0x14] sm:$0xf]
      %v199 = vld [vmem:[%s1 + $0x18] sm:$0xf]
      %v200 = vld [vmem:[%s1 + $0x1c] sm:$0xf]
      %v201 = vld [vmem:[%s1 + $0x20] sm:$0xf]
      %v202 = vld [vmem:[%s1 + $0x24] sm:$0xf]
      %v203 = vld [vmem:[%s1 + $0x28] sm:$0xf]
      %v204 = vld [vmem:[%s1 + $0x2c] sm:$0xf]
      %v205 = vld [vmem:[%s1 + $0x30] sm:$0xf]
      %v206 = vld [vmem:[%s1 + $0x34] sm:$0xf]
      %v207 = vld [vmem:[%s1 + $0x38] sm:$0xf]
      %v208 = vld [vmem:[%s1 + $0x3c] sm:$0xf]
      %s209 = scalar_lea.vmem %s169, 8
      %v210 = vld [vmem:[%s209] sm:$0xf]
      %v211 = vld [vmem:[%s209 + $0x4] sm:$0xf]
      %v212 = vld [vmem:[%s209 + $0x20] sm:$0xf]
      %v213 = vld [vmem:[%s209 + $0x24] sm:$0xf]
      %v214 = vld [vmem:[%s209 + $0x40] sm:$0xf]
      %v215 = vld [vmem:[%s209 + $0x44] sm:$0xf]
      %v216 = vld [vmem:[%s209 + $0x60] sm:$0xf]
      %v217 = vld [vmem:[%s209 + $0x64] sm:$0xf]
      %v218 = vld [vmem:[%s209 + $0x80] sm:$0xf]
      %v219 = vld [vmem:[%s209 + $0x84] sm:$0xf]
      %v220 = vld [vmem:[%s209 + $0xa0] sm:$0xf]
      %v221 = vld [vmem:[%s209 + $0xa4] sm:$0xf]
      %v222 = vld [vmem:[%s209 + $0xc0] sm:$0xf]
      %v223 = vld [vmem:[%s209 + $0xc4] sm:$0xf]
      %v224 = vld [vmem:[%s209 + $0xe0] sm:$0xf]
      %v225 = vld [vmem:[%s209 + $0xe4] sm:$0xf]
      %s226 = scalar_lea.vmem %s1, 64
      %v227 = vld [vmem:[%s226] sm:$0xf]
      %v228 = vld [vmem:[%s226 + $0x4] sm:$0xf]
      %v229 = vld [vmem:[%s226 + $0x8] sm:$0xf]
      %v230 = vld [vmem:[%s226 + $0xc] sm:$0xf]
      %v231 = vld [vmem:[%s226 + $0x10] sm:$0xf]
      %v232 = vld [vmem:[%s226 + $0x14] sm:$0xf]
      %v233 = vld [vmem:[%s226 + $0x18] sm:$0xf]
      %v234 = vld [vmem:[%s226 + $0x1c] sm:$0xf]
      %v235 = vld [vmem:[%s226 + $0x20] sm:$0xf]
      %v236 = vld [vmem:[%s226 + $0x24] sm:$0xf]
      %v237 = vld [vmem:[%s226 + $0x28] sm:$0xf]
      %v238 = vld [vmem:[%s226 + $0x2c] sm:$0xf]
      %v239 = vld [vmem:[%s226 + $0x30] sm:$0xf]
      %v240 = vld [vmem:[%s226 + $0x34] sm:$0xf]
      %v241 = vld [vmem:[%s226 + $0x38] sm:$0xf]
      %v242 = vld [vmem:[%s226 + $0x3c] sm:$0xf]
      %v259 = vunpack.c.l.b16 %v210
      %v260 = vunpack.c.l.b16 %v211
      %v261 = vunpack.c.l.b16 %v212
      %v262 = vunpack.c.l.b16 %v213
      %v263 = vunpack.c.l.b16 %v214
      %v264 = vunpack.c.l.b16 %v215
      %v265 = vunpack.c.l.b16 %v216
      %v266 = vunpack.c.l.b16 %v217
      %v267 = vunpack.c.l.b16 %v218
      %v268 = vunpack.c.l.b16 %v219
      %v269 = vunpack.c.l.b16 %v220
      %v270 = vunpack.c.l.b16 %v221
      %v271 = vunpack.c.l.b16 %v222
      %v272 = vunpack.c.l.b16 %v223
      %v273 = vunpack.c.l.b16 %v224
      %v274 = vunpack.c.l.b16 %v225
      %v275 = vpack.c.b16 %v260, %v259
      %v276 = vpack.c.b16 %v262, %v261
      %v277 = vpack.c.b16 %v264, %v263
      %v278 = vpack.c.b16 %v266, %v265
      %v279 = vpack.c.b16 %v268, %v267
      %v280 = vpack.c.b16 %v270, %v269
      %v281 = vpack.c.b16 %v272, %v271
      %v282 = vpack.c.b16 %v274, %v273
      %v307 = vunpack.c.l.b16 %v227
      %v308 = vunpack.c.l.b16 %v228
      %v309 = vunpack.c.l.b16 %v229
      %v310 = vunpack.c.l.b16 %v230
      %v311 = vunpack.c.l.b16 %v231
      %v312 = vunpack.c.l.b16 %v232
      %v313 = vunpack.c.l.b16 %v233
      %v314 = vunpack.c.l.b16 %v234
      %v315 = vunpack.c.l.b16 %v235
      %v316 = vunpack.c.l.b16 %v236
      %v317 = vunpack.c.l.b16 %v237
      %v318 = vunpack.c.l.b16 %v238
      %v319 = vunpack.c.l.b16 %v239
      %v320 = vunpack.c.l.b16 %v240
      %v321 = vunpack.c.l.b16 %v241
      %v322 = vunpack.c.l.b16 %v242
      %v323 = vpack.c.b16 %v308, %v307
      %v324 = vpack.c.b16 %v310, %v309
      %v325 = vpack.c.b16 %v312, %v311
      %v326 = vpack.c.b16 %v314, %v313
      %v327 = vpack.c.b16 %v316, %v315
      %v328 = vpack.c.b16 %v318, %v317
      %v329 = vpack.c.b16 %v320, %v319
      %v330 = vpack.c.b16 %v322, %v321
      %339 = vmatpush.bf16.msra.mxu0 %v330
      %340 = vmatpush.bf16.msra.mxu0 %v329
      %341 = vmatpush.bf16.msra.mxu0 %v328
      %342 = vmatpush.bf16.msra.mxu0 %v327
      %343 = vmatpush.bf16.msra.mxu0 %v326
      %344 = vmatpush.bf16.msra.mxu0 %v325
      %345 = vmatpush.bf16.msra.mxu0 %v324
      %346 = vmatpush.bf16.msra.mxu0 %v323
      %347 = vmatmul.bf16.gmra.mxu0 %v275
      %v348 = vpop.f32.mrf.mxu0
      %v349 = vadd.f32 0.0, %v348
      %v350 = vpop.f32.mrf.mxu0
      %v351 = vadd.f32 0.0, %v350
      %352 = vmatmul.bf16.gmra.mxu0 %v276
      %v353 = vpop.f32.mrf.mxu0
      %v354 = vadd.f32 0.0, %v353
      %v355 = vpop.f32.mrf.mxu0
      %v356 = vadd.f32 0.0, %v355
      %357 = vmatmul.bf16.gmra.mxu0 %v277
      %v358 = vpop.f32.mrf.mxu0
      %v359 = vadd.f32 0.0, %v358
      %v360 = vpop.f32.mrf.mxu0
      %v361 = vadd.f32 0.0, %v360
      %362 = vmatmul.bf16.gmra.mxu0 %v278
      %v363 = vpop.f32.mrf.mxu0
      %v364 = vadd.f32 0.0, %v363
      %v365 = vpop.f32.mrf.mxu0
      %v366 = vadd.f32 0.0, %v365
      %367 = vmatmul.bf16.gmra.mxu0 %v279
      %v368 = vpop.f32.mrf.mxu0
      %v369 = vadd.f32 0.0, %v368
      %v370 = vpop.f32.mrf.mxu0
      %v371 = vadd.f32 0.0, %v370
      %372 = vmatmul.bf16.gmra.mxu0 %v280
      %v373 = vpop.f32.mrf.mxu0
      %v374 = vadd.f32 0.0, %v373
      %v375 = vpop.f32.mrf.mxu0
      %v376 = vadd.f32 0.0, %v375
      %377 = vmatmul.bf16.gmra.mxu0 %v281
      %v378 = vpop.f32.mrf.mxu0
      %v379 = vadd.f32 0.0, %v378
      %v380 = vpop.f32.mrf.mxu0
      %v381 = vadd.f32 0.0, %v380
      %382 = vmatmul.bf16.gmra.mxu0 %v282
      %v383 = vpop.f32.mrf.mxu0
      %v384 = vadd.f32 0.0, %v383
      %v385 = vpop.f32.mrf.mxu0
      %v386 = vadd.f32 0.0, %v385
      %387 = vdwg.mxu0
      %v404 = vunpack.c.l.b16 %v177
      %v405 = vunpack.c.l.b16 %v178
      %v406 = vunpack.c.l.b16 %v179
      %v407 = vunpack.c.l.b16 %v180
      %v408 = vunpack.c.l.b16 %v181
      %v409 = vunpack.c.l.b16 %v182
      %v410 = vunpack.c.l.b16 %v183
      %v411 = vunpack.c.l.b16 %v184
      %v412 = vunpack.c.l.b16 %v185
      %v413 = vunpack.c.l.b16 %v186
      %v414 = vunpack.c.l.b16 %v187
      %v415 = vunpack.c.l.b16 %v188
      %v416 = vunpack.c.l.b16 %v189
      %v417 = vunpack.c.l.b16 %v190
      %v418 = vunpack.c.l.b16 %v191
      %v419 = vunpack.c.l.b16 %v192
      %v420 = vpack.c.b16 %v405, %v404
      %v421 = vpack.c.b16 %v407, %v406
      %v422 = vpack.c.b16 %v409, %v408
      %v423 = vpack.c.b16 %v411, %v410
      %v424 = vpack.c.b16 %v413, %v412
      %v425 = vpack.c.b16 %v415, %v414
      %v426 = vpack.c.b16 %v417, %v416
      %v427 = vpack.c.b16 %v419, %v418
      %v452 = vunpack.c.l.b16 %v193
      %v453 = vunpack.c.l.b16 %v194
      %v454 = vunpack.c.l.b16 %v195
      %v455 = vunpack.c.l.b16 %v196
      %v456 = vunpack.c.l.b16 %v197
      %v457 = vunpack.c.l.b16 %v198
      %v458 = vunpack.c.l.b16 %v199
      %v459 = vunpack.c.l.b16 %v200
      %v460 = vunpack.c.l.b16 %v201
      %v461 = vunpack.c.l.b16 %v202
      %v462 = vunpack.c.l.b16 %v203
      %v463 = vunpack.c.l.b16 %v204
      %v464 = vunpack.c.l.b16 %v205
      %v465 = vunpack.c.l.b16 %v206
      %v466 = vunpack.c.l.b16 %v207
      %v467 = vunpack.c.l.b16 %v208
      %v468 = vpack.c.b16 %v453, %v452
      %v469 = vpack.c.b16 %v455, %v454
      %v470 = vpack.c.b16 %v457, %v456
      %v471 = vpack.c.b16 %v459, %v458
      %v472 = vpack.c.b16 %v461, %v460
      %v473 = vpack.c.b16 %v463, %v462
      %v474 = vpack.c.b16 %v465, %v464
      %v475 = vpack.c.b16 %v467, %v466
      %484 = vmatpush.bf16.msra.mxu0 %v475
      %485 = vmatpush.bf16.msra.mxu0 %v474
      %486 = vmatpush.bf16.msra.mxu0 %v473
      %487 = vmatpush.bf16.msra.mxu0 %v472
      %488 = vmatpush.bf16.msra.mxu0 %v471
      %489 = vmatpush.bf16.msra.mxu0 %v470
      %490 = vmatpush.bf16.msra.mxu0 %v469
      %491 = vmatpush.bf16.msra.mxu0 %v468
      %492 = vmatmul.bf16.gmra.mxu0 %v420
      %v493 = vpop.f32.mrf.mxu0
      %v494 = vadd.f32 %v349, %v493
      %v495 = vpop.f32.mrf.mxu0
      %v496 = vadd.f32 %v351, %v495
      %497 = vmatmul.bf16.gmra.mxu0 %v421
      %v498 = vpop.f32.mrf.mxu0
      %v499 = vadd.f32 %v354, %v498
      %v500 = vpop.f32.mrf.mxu0
      %v501 = vadd.f32 %v356, %v500
      %502 = vmatmul.bf16.gmra.mxu0 %v422
      %v503 = vpop.f32.mrf.mxu0
      %v504 = vadd.f32 %v359, %v503
      %v505 = vpop.f32.mrf.mxu0
      %v506 = vadd.f32 %v361, %v505
      %507 = vmatmul.bf16.gmra.mxu0 %v423
      %v508 = vpop.f32.mrf.mxu0
      %v509 = vadd.f32 %v364, %v508
      %v510 = vpop.f32.mrf.mxu0
      %v511 = vadd.f32 %v366, %v510
      %512 = vmatmul.bf16.gmra.mxu0 %v424
      %v513 = vpop.f32.mrf.mxu0
      %v514 = vadd.f32 %v369, %v513
      %v515 = vpop.f32.mrf.mxu0
      %v516 = vadd.f32 %v371, %v515
      %517 = vmatmul.bf16.gmra.mxu0 %v425
      %v518 = vpop.f32.mrf.mxu0
      %v519 = vadd.f32 %v374, %v518
      %v520 = vpop.f32.mrf.mxu0
      %v521 = vadd.f32 %v376, %v520
      %522 = vmatmul.bf16.gmra.mxu0 %v426
      %v523 = vpop.f32.mrf.mxu0
      %v524 = vadd.f32 %v379, %v523
      %v525 = vpop.f32.mrf.mxu0
      %v526 = vadd.f32 %v381, %v525
      %527 = vmatmul.bf16.gmra.mxu0 %v427
      %v528 = vpop.f32.mrf.mxu0
      %v529 = vadd.f32 %v384, %v528
      %v530 = vpop.f32.mrf.mxu0
      %v531 = vadd.f32 %v386, %v530
      %532 = vdwg.mxu0
      %s533 = scalar_lea.vmem %s169, 16
      %v534 = vld [vmem:[%s533] sm:$0xf]
      %v535 = vld [vmem:[%s533 + $0x4] sm:$0xf]
      %v536 = vld [vmem:[%s533 + $0x20] sm:$0xf]
      %v537 = vld [vmem:[%s533 + $0x24] sm:$0xf]
      %v538 = vld [vmem:[%s533 + $0x40] sm:$0xf]
      %v539 = vld [vmem:[%s533 + $0x44] sm:$0xf]
      %v540 = vld [vmem:[%s533 + $0x60] sm:$0xf]
      %v541 = vld [vmem:[%s533 + $0x64] sm:$0xf]
      %v542 = vld [vmem:[%s533 + $0x80] sm:$0xf]
      %v543 = vld [vmem:[%s533 + $0x84] sm:$0xf]
      %v544 = vld [vmem:[%s533 + $0xa0] sm:$0xf]
      %v545 = vld [vmem:[%s533 + $0xa4] sm:$0xf]
      %v546 = vld [vmem:[%s533 + $0xc0] sm:$0xf]
      %v547 = vld [vmem:[%s533 + $0xc4] sm:$0xf]
      %v548 = vld [vmem:[%s533 + $0xe0] sm:$0xf]
      %v549 = vld [vmem:[%s533 + $0xe4] sm:$0xf]
      %s550 = scalar_lea.vmem %s1, 128
      %v551 = vld [vmem:[%s550] sm:$0xf]
      %v552 = vld [vmem:[%s550 + $0x4] sm:$0xf]
      %v553 = vld [vmem:[%s550 + $0x8] sm:$0xf]
      %v554 = vld [vmem:[%s550 + $0xc] sm:$0xf]
      %v555 = vld [vmem:[%s550 + $0x10] sm:$0xf]
      %v556 = vld [vmem:[%s550 + $0x14] sm:$0xf]
      %v557 = vld [vmem:[%s550 + $0x18] sm:$0xf]
      %v558 = vld [vmem:[%s550 + $0x1c] sm:$0xf]
      %v559 = vld [vmem:[%s550 + $0x20] sm:$0xf]
      %v560 = vld [vmem:[%s550 + $0x24] sm:$0xf]
      %v561 = vld [vmem:[%s550 + $0x28] sm:$0xf]
      %v562 = vld [vmem:[%s550 + $0x2c] sm:$0xf]
      %v563 = vld [vmem:[%s550 + $0x30] sm:$0xf]
      %v564 = vld [vmem:[%s550 + $0x34] sm:$0xf]
      %v565 = vld [vmem:[%s550 + $0x38] sm:$0xf]
      %v566 = vld [vmem:[%s550 + $0x3c] sm:$0xf]
      %v583 = vunpack.c.l.b16 %v534
      %v584 = vunpack.c.l.b16 %v535
      %v585 = vunpack.c.l.b16 %v536
      %v586 = vunpack.c.l.b16 %v537
      %v587 = vunpack.c.l.b16 %v538
      %v588 = vunpack.c.l.b16 %v539
      %v589 = vunpack.c.l.b16 %v540
      %v590 = vunpack.c.l.b16 %v541
      %v591 = vunpack.c.l.b16 %v542
      %v592 = vunpack.c.l.b16 %v543
      %v593 = vunpack.c.l.b16 %v544
      %v594 = vunpack.c.l.b16 %v545
      %v595 = vunpack.c.l.b16 %v546
      %v596 = vunpack.c.l.b16 %v547
      %v597 = vunpack.c.l.b16 %v548
      %v598 = vunpack.c.l.b16 %v549
      %v599 = vpack.c.b16 %v584, %v583
      %v600 = vpack.c.b16 %v586, %v585
      %v601 = vpack.c.b16 %v588, %v587
      %v602 = vpack.c.b16 %v590, %v589
      %v603 = vpack.c.b16 %v592, %v591
      %v604 = vpack.c.b16 %v594, %v593
      %v605 = vpack.c.b16 %v596, %v595
      %v606 = vpack.c.b16 %v598, %v597
      %v631 = vunpack.c.l.b16 %v551
      %v632 = vunpack.c.l.b16 %v552
      %v633 = vunpack.c.l.b16 %v553
      %v634 = vunpack.c.l.b16 %v554
      %v635 = vunpack.c.l.b16 %v555
      %v636 = vunpack.c.l.b16 %v556
      %v637 = vunpack.c.l.b16 %v557
      %v638 = vunpack.c.l.b16 %v558
      %v639 = vunpack.c.l.b16 %v559
      %v640 = vunpack.c.l.b16 %v560
      %v641 = vunpack.c.l.b16 %v561
      %v642 = vunpack.c.l.b16 %v562
      %v643 = vunpack.c.l.b16 %v563
      %v644 = vunpack.c.l.b16 %v564
      %v645 = vunpack.c.l.b16 %v565
      %v646 = vunpack.c.l.b16 %v566
      %v647 = vpack.c.b16 %v632, %v631
      %v648 = vpack.c.b16 %v634, %v633
      %v649 = vpack.c.b16 %v636, %v635
      %v650 = vpack.c.b16 %v638, %v637
      %v651 = vpack.c.b16 %v640, %v639
      %v652 = vpack.c.b16 %v642, %v641
      %v653 = vpack.c.b16 %v644, %v643
      %v654 = vpack.c.b16 %v646, %v645
      %663 = vmatpush.bf16.msra.mxu0 %v654
      %664 = vmatpush.bf16.msra.mxu0 %v653
      %665 = vmatpush.bf16.msra.mxu0 %v652
      %666 = vmatpush.bf16.msra.mxu0 %v651
      %667 = vmatpush.bf16.msra.mxu0 %v650
      %668 = vmatpush.bf16.msra.mxu0 %v649
      %669 = vmatpush.bf16.msra.mxu0 %v648
      %670 = vmatpush.bf16.msra.mxu0 %v647
      %671 = vmatmul.bf16.gmra.mxu0 %v599
      %v672 = vpop.f32.mrf.mxu0
      %v673 = vadd.f32 0.0, %v672
      %v674 = vpop.f32.mrf.mxu0
      %v675 = vadd.f32 0.0, %v674
      %676 = vmatmul.bf16.gmra.mxu0 %v600
      %v677 = vpop.f32.mrf.mxu0
      %v678 = vadd.f32 0.0, %v677
      %v679 = vpop.f32.mrf.mxu0
      %v680 = vadd.f32 0.0, %v679
      %681 = vmatmul.bf16.gmra.mxu0 %v601
      %v682 = vpop.f32.mrf.mxu0
      %v683 = vadd.f32 0.0, %v682
      %v684 = vpop.f32.mrf.mxu0
      %v685 = vadd.f32 0.0, %v684
      %686 = vmatmul.bf16.gmra.mxu0 %v602
      %v687 = vpop.f32.mrf.mxu0
      %v688 = vadd.f32 0.0, %v687
      %v689 = vpop.f32.mrf.mxu0
      %v690 = vadd.f32 0.0, %v689
      %691 = vmatmul.bf16.gmra.mxu0 %v603
      %v692 = vpop.f32.mrf.mxu0
      %v693 = vadd.f32 0.0, %v692
      %v694 = vpop.f32.mrf.mxu0
      %v695 = vadd.f32 0.0, %v694
      %696 = vmatmul.bf16.gmra.mxu0 %v604
      %v697 = vpop.f32.mrf.mxu0
      %v698 = vadd.f32 0.0, %v697
      %v699 = vpop.f32.mrf.mxu0
      %v700 = vadd.f32 0.0, %v699
      %701 = vmatmul.bf16.gmra.mxu0 %v605
      %v702 = vpop.f32.mrf.mxu0
      %v703 = vadd.f32 0.0, %v702
      %v704 = vpop.f32.mrf.mxu0
      %v705 = vadd.f32 0.0, %v704
      %706 = vmatmul.bf16.gmra.mxu0 %v606
      %v707 = vpop.f32.mrf.mxu0
      %v708 = vadd.f32 0.0, %v707
      %v709 = vpop.f32.mrf.mxu0
      %v710 = vadd.f32 0.0, %v709
      %711 = vdwg.mxu0
      %v712 = vadd.f32 %v494, %v673
      %v713 = vadd.f32 %v496, %v675
      %v714 = vadd.f32 %v499, %v678
      %v715 = vadd.f32 %v501, %v680
      %v716 = vadd.f32 %v504, %v683
      %v717 = vadd.f32 %v506, %v685
      %v718 = vadd.f32 %v509, %v688
      %v719 = vadd.f32 %v511, %v690
      %v720 = vadd.f32 %v514, %v693
      %v721 = vadd.f32 %v516, %v695
      %v722 = vadd.f32 %v519, %v698
      %v723 = vadd.f32 %v521, %v700
      %v724 = vadd.f32 %v524, %v703
      %v725 = vadd.f32 %v526, %v705
      %v726 = vadd.f32 %v529, %v708
      %v727 = vadd.f32 %v531, %v710
      %s728 = scalar_lea.vmem %s169, 24
      %v729 = vld [vmem:[%s728] sm:$0xf]
      %v730 = vld [vmem:[%s728 + $0x4] sm:$0xf]
      %v731 = vld [vmem:[%s728 + $0x20] sm:$0xf]
      %v732 = vld [vmem:[%s728 + $0x24] sm:$0xf]
      %v733 = vld [vmem:[%s728 + $0x40] sm:$0xf]
      %v734 = vld [vmem:[%s728 + $0x44] sm:$0xf]
      %v735 = vld [vmem:[%s728 + $0x60] sm:$0xf]
      %v736 = vld [vmem:[%s728 + $0x64] sm:$0xf]
      %v737 = vld [vmem:[%s728 + $0x80] sm:$0xf]
      %v738 = vld [vmem:[%s728 + $0x84] sm:$0xf]
      %v739 = vld [vmem:[%s728 + $0xa0] sm:$0xf]
      %v740 = vld [vmem:[%s728 + $0xa4] sm:$0xf]
      %v741 = vld [vmem:[%s728 + $0xc0] sm:$0xf]
      %v742 = vld [vmem:[%s728 + $0xc4] sm:$0xf]
      %v743 = vld [vmem:[%s728 + $0xe0] sm:$0xf]
      %v744 = vld [vmem:[%s728 + $0xe4] sm:$0xf]
      %s745 = scalar_lea.vmem %s1, 192
      %v746 = vld [vmem:[%s745] sm:$0xf]
      %v747 = vld [vmem:[%s745 + $0x4] sm:$0xf]
      %v748 = vld [vmem:[%s745 + $0x8] sm:$0xf]
      %v749 = vld [vmem:[%s745 + $0xc] sm:$0xf]
      %v750 = vld [vmem:[%s745 + $0x10] sm:$0xf]
      %v751 = vld [vmem:[%s745 + $0x14] sm:$0xf]
      %v752 = vld [vmem:[%s745 + $0x18] sm:$0xf]
      %v753 = vld [vmem:[%s745 + $0x1c] sm:$0xf]
      %v754 = vld [vmem:[%s745 + $0x20] sm:$0xf]
      %v755 = vld [vmem:[%s745 + $0x24] sm:$0xf]
      %v756 = vld [vmem:[%s745 + $0x28] sm:$0xf]
      %v757 = vld [vmem:[%s745 + $0x2c] sm:$0xf]
      %v758 = vld [vmem:[%s745 + $0x30] sm:$0xf]
      %v759 = vld [vmem:[%s745 + $0x34] sm:$0xf]
      %v760 = vld [vmem:[%s745 + $0x38] sm:$0xf]
      %v761 = vld [vmem:[%s745 + $0x3c] sm:$0xf]
      %v778 = vunpack.c.l.b16 %v729
      %v779 = vunpack.c.l.b16 %v730
      %v780 = vunpack.c.l.b16 %v731
      %v781 = vunpack.c.l.b16 %v732
      %v782 = vunpack.c.l.b16 %v733
      %v783 = vunpack.c.l.b16 %v734
      %v784 = vunpack.c.l.b16 %v735
      %v785 = vunpack.c.l.b16 %v736
      %v786 = vunpack.c.l.b16 %v737
      %v787 = vunpack.c.l.b16 %v738
      %v788 = vunpack.c.l.b16 %v739
      %v789 = vunpack.c.l.b16 %v740
      %v790 = vunpack.c.l.b16 %v741
      %v791 = vunpack.c.l.b16 %v742
      %v792 = vunpack.c.l.b16 %v743
      %v793 = vunpack.c.l.b16 %v744
      %v794 = vpack.c.b16 %v779, %v778
      %v795 = vpack.c.b16 %v781, %v780
      %v796 = vpack.c.b16 %v783, %v782
      %v797 = vpack.c.b16 %v785, %v784
      %v798 = vpack.c.b16 %v787, %v786
      %v799 = vpack.c.b16 %v789, %v788
      %v800 = vpack.c.b16 %v791, %v790
      %v801 = vpack.c.b16 %v793, %v792
      %v826 = vunpack.c.l.b16 %v746
      %v827 = vunpack.c.l.b16 %v747
      %v828 = vunpack.c.l.b16 %v748
      %v829 = vunpack.c.l.b16 %v749
      %v830 = vunpack.c.l.b16 %v750
      %v831 = vunpack.c.l.b16 %v751
      %v832 = vunpack.c.l.b16 %v752
      %v833 = vunpack.c.l.b16 %v753
      %v834 = vunpack.c.l.b16 %v754
      %v835 = vunpack.c.l.b16 %v755
      %v836 = vunpack.c.l.b16 %v756
      %v837 = vunpack.c.l.b16 %v757
      %v838 = vunpack.c.l.b16 %v758
      %v839 = vunpack.c.l.b16 %v759
      %v840 = vunpack.c.l.b16 %v760
      %v841 = vunpack.c.l.b16 %v761
      %v842 = vpack.c.b16 %v827, %v826
      %v843 = vpack.c.b16 %v829, %v828
      %v844 = vpack.c.b16 %v831, %v830
      %v845 = vpack.c.b16 %v833, %v832
      %v846 = vpack.c.b16 %v835, %v834
      %v847 = vpack.c.b16 %v837, %v836
      %v848 = vpack.c.b16 %v839, %v838
      %v849 = vpack.c.b16 %v841, %v840
      %858 = vmatpush.bf16.msra.mxu0 %v849
      %859 = vmatpush.bf16.msra.mxu0 %v848
      %860 = vmatpush.bf16.msra.mxu0 %v847
      %861 = vmatpush.bf16.msra.mxu0 %v846
      %862 = vmatpush.bf16.msra.mxu0 %v845
      %863 = vmatpush.bf16.msra.mxu0 %v844
      %864 = vmatpush.bf16.msra.mxu0 %v843
      %865 = vmatpush.bf16.msra.mxu0 %v842
      %866 = vmatmul.bf16.gmra.mxu0 %v794
      %v867 = vpop.f32.mrf.mxu0
      %v868 = vadd.f32 0.0, %v867
      %v869 = vpop.f32.mrf.mxu0
      %v870 = vadd.f32 0.0, %v869
      %871 = vmatmul.bf16.gmra.mxu0 %v795
      %v872 = vpop.f32.mrf.mxu0
      %v873 = vadd.f32 0.0, %v872
      %v874 = vpop.f32.mrf.mxu0
      %v875 = vadd.f32 0.0, %v874
      %876 = vmatmul.bf16.gmra.mxu0 %v796
      %v877 = vpop.f32.mrf.mxu0
      %v878 = vadd.f32 0.0, %v877
      %v879 = vpop.f32.mrf.mxu0
      %v880 = vadd.f32 0.0, %v879
      %881 = vmatmul.bf16.gmra.mxu0 %v797
      %v882 = vpop.f32.mrf.mxu0
      %v883 = vadd.f32 0.0, %v882
      %v884 = vpop.f32.mrf.mxu0
      %v885 = vadd.f32 0.0, %v884
      %886 = vmatmul.bf16.gmra.mxu0 %v798
      %v887 = vpop.f32.mrf.mxu0
      %v888 = vadd.f32 0.0, %v887
      %v889 = vpop.f32.mrf.mxu0
      %v890 = vadd.f32 0.0, %v889
      %891 = vmatmul.bf16.gmra.mxu0 %v799
      %v892 = vpop.f32.mrf.mxu0
      %v893 = vadd.f32 0.0, %v892
      %v894 = vpop.f32.mrf.mxu0
      %v895 = vadd.f32 0.0, %v894
      %896 = vmatmul.bf16.gmra.mxu0 %v800
      %v897 = vpop.f32.mrf.mxu0
      %v898 = vadd.f32 0.0, %v897
      %v899 = vpop.f32.mrf.mxu0
      %v900 = vadd.f32 0.0, %v899
      %901 = vmatmul.bf16.gmra.mxu0 %v801
      %v902 = vpop.f32.mrf.mxu0
      %v903 = vadd.f32 0.0, %v902
      %v904 = vpop.f32.mrf.mxu0
      %v905 = vadd.f32 0.0, %v904
      %906 = vdwg.mxu0
      %v907 = vadd.f32 %v712, %v868
      %v908 = vadd.f32 %v713, %v870
      %v909 = vadd.f32 %v714, %v873
      %v910 = vadd.f32 %v715, %v875
      %v911 = vadd.f32 %v716, %v878
      %v912 = vadd.f32 %v717, %v880
      %v913 = vadd.f32 %v718, %v883
      %v914 = vadd.f32 %v719, %v885
      %v915 = vadd.f32 %v720, %v888
      %v916 = vadd.f32 %v721, %v890
      %v917 = vadd.f32 %v722, %v893
      %v918 = vadd.f32 %v723, %v895
      %v919 = vadd.f32 %v724, %v898
      %v920 = vadd.f32 %v725, %v900
      %v921 = vadd.f32 %v726, %v903
      %v922 = vadd.f32 %v727, %v905
      %v923 = vld [vmem:[%s2] sm:$0x1]
      %v925 = vperm.slane %v923, 0
      %v927 = vadd.f32 %v907, %v925
      %v928 = vadd.f32 %v908, %v925
      %v929 = vadd.f32 %v909, %v925
      %v930 = vadd.f32 %v910, %v925
      %v931 = vadd.f32 %v911, %v925
      %v932 = vadd.f32 %v912, %v925
      %v933 = vadd.f32 %v913, %v925
      %v934 = vadd.f32 %v914, %v925
      %v935 = vadd.f32 %v915, %v925
      %v936 = vadd.f32 %v916, %v925
      %v937 = vadd.f32 %v917, %v925
      %v938 = vadd.f32 %v918, %v925
      %v939 = vadd.f32 %v919, %v925
      %v940 = vadd.f32 %v920, %v925
      %v941 = vadd.f32 %v921, %v925
      %v942 = vadd.f32 %v922, %v925
      %vm943 = vcmask 261120
      %944 = vst.msk [vmem:[%s175] sm:$0xff] %vm943, %v927
      %945 = vst.msk [vmem:[%s175 + $0x8] sm:$0xff] %vm943, %v928
      %946 = vst.msk [vmem:[%s175 + $0x10] sm:$0xff] %vm943, %v929
      %947 = vst.msk [vmem:[%s175 + $0x18] sm:$0xff] %vm943, %v930
      %948 = vst.msk [vmem:[%s175 + $0x20] sm:$0xff] %vm943, %v931
      %949 = vst.msk [vmem:[%s175 + $0x28] sm:$0xff] %vm943, %v932
      %950 = vst.msk [vmem:[%s175 + $0x30] sm:$0xff] %vm943, %v933
      %951 = vst.msk [vmem:[%s175 + $0x38] sm:$0xff] %vm943, %v934
      %952 = vst.msk [vmem:[%s175 + $0x40] sm:$0xff] %vm943, %v935
      %953 = vst.msk [vmem:[%s175 + $0x48] sm:$0xff] %vm943, %v936
      %954 = vst.msk [vmem:[%s175 + $0x50] sm:$0xff] %vm943, %v937
      %955 = vst.msk [vmem:[%s175 + $0x58] sm:$0xff] %vm943, %v938
      %956 = vst.msk [vmem:[%s175 + $0x60] sm:$0xff] %vm943, %v939
      %957 = vst.msk [vmem:[%s175 + $0x68] sm:$0xff] %vm943, %v940
      %958 = vst.msk [vmem:[%s175 + $0x70] sm:$0xff] %vm943, %v941
      %959 = vst.msk [vmem:[%s175 + $0x78] sm:$0xff] %vm943, %v942
      %s960 = smul.u32 16, %s14
      %p961 = scmp.lt.s32.totalorder %s960, 63
      %s962 = scalar_select %p961, %s960, 63
      %s963 = smul.addr %s962, 8
      %s964 = scalar_lea.vmem %s3, %s963
      // Predicated region
      $region33: #{_lambda_.1} parent=31 // pred_check
        %p965 = pneg %p100
      $region34: #{_lambda_.1} parent=31 // pred_check_branch
        %967 = sbr.rel (%p965) target = $region36
      $region35: #{_lambda_.1} parent=31 // pred_region
        %s968 = smul.u32 16, %s14
      $region36: #{_lambda_.1} parent=31 // pred_fallthru
        _
    $region32: #{_lambda_.1} parent=5 // pred_fallthru
      _
    %p969 = scmp.le.s32.totalorder 2, %s9
    // Predicated region
    $region37: #{_lambda_.1} parent=5 // pred_check
      %p970 = pneg %p969
    $region38: #{_lambda_.1} parent=5 // pred_check_branch
      %972 = sbr.rel (%p970) target = $region40
    $region39: #{_lambda_.1} parent=5 // pred_region
      %s973 = ssub.s32 %s9, 2
      // Predicated region
      $region41: #{_lambda_.1} parent=39 // pred_check
        %p974 = pneg %p106
      $region42: #{_lambda_.1} parent=39 // pred_check_branch
        %976 = sbr.rel (%p974) target = $region44
      $region43: #{_lambda_.1} parent=39 // pred_region
        %s977 = smul.u32 16, %s15
        %p978 = scmp.lt.s32.totalorder %s977, 63
        %s979 = scalar_select %p978, %s977, 63
        %s980 = smul.addr %s979, 8
        %s981 = scalar_lea.vmem %s3, %s980
      $region44: #{_lambda_.1} parent=39 // pred_fallthru
        _
    $region40: #{_lambda_.1} parent=5 // pred_fallthru
      _
  $region6: #{_lambda_.1} parent=0 // loop_footer
    %s13 = sadd.s32 1, %s9
  $region7: #{_lambda_.1} parent=0 // loop_footer_branch
    %8 = sbr.rel target = $region3
  $region8: #{_lambda_.1} parent=0 // loop_exit
    _

</llo_original>
